<compile_context>
chip_gen: v6e
topology: v6e:2x2x1
jax: 0.10.0
libtpu: 0.0.40
codegen_flags: <defaults>
</compile_context>

<pallas_src>
import functools

import jax
import jax.numpy as jnp
from jax.experimental import pallas as pl
from jax.experimental.pallas import tpu as pltpu

INPUT_D = 29
OUTPUT_D = 50
EMB_D = 128
MID_D = 256
OUT_PAD = 128  # lane-dense (multiple of 128) head width; sliced back to 50


def _mlp_kernel(x_ref, w1_ref, b1_ref, w2_ref, b2_ref, w3_ref, b3_ref,
                emb_ref, out_ref):
    # x / weights arrive as bf16 (native MXU input). All three dots accumulate
    # in f32 on the MXU; bias-add + ReLU run in f32 on the VPU; activations are
    # re-cast to bf16 only to feed the next MXU pass.
    x = x_ref[...]                                                       # [tb, 29] bf16
    h = jnp.dot(x, w1_ref[...], preferred_element_type=jnp.float32)      # [tb, 256] f32
    h = jnp.maximum(h + b1_ref[...], 0.0)                                # ReLU (f32)
    emb = jnp.dot(h.astype(jnp.bfloat16), w2_ref[...],
                  preferred_element_type=jnp.float32) + b2_ref[...]      # [tb, 128] f32
    out = jnp.dot(emb.astype(jnp.bfloat16), w3_ref[...],
                  preferred_element_type=jnp.float32) + b3_ref[...]      # [tb, 128] f32
    emb_ref[...] = emb.astype(emb_ref.dtype)
    out_ref[...] = out.astype(out_ref.dtype)


def _round_up(a, m):
    return (a + m - 1) // m * m


@functools.partial(jax.jit, static_argnames=("block_b",))
def mlp_regressor_forward(x, params, *, block_b=1024):
    """Returns (emb, out) exactly like MLP_Regressor.forward (float32 outputs)."""
    w1, b1, w2, b2, w3, b3 = params
    B = x.shape[0]

    # ---- choose batch tile (static, shape-derived) ------------------------
    tb = _round_up(min(block_b, max(8, _round_up(B, 8))), 8)
    # Keep >= 2 grid steps when possible so both v7x TensorCores get work
    # (the one extra step is negligible on v5e/v6e's single TC).
    if _round_up(B, tb) // tb < 2 and tb >= 16:
        tb = _round_up(tb // 2, 8)
    B_pad = _round_up(B, tb)
    grid = (B_pad // tb,)

    # ---- prepare operands --------------------------------------------------
    x_p = x.astype(jnp.bfloat16)
    if B_pad != B:
        x_p = jnp.pad(x_p, ((0, B_pad - B), (0, 0)))
    w1b = w1.astype(jnp.bfloat16)
    w2b = w2.astype(jnp.bfloat16)
    # Zero-pad the 50-wide head to 128 lanes -> unmasked, lane-dense stores.
    w3b = jnp.pad(w3, ((0, 0), (0, OUT_PAD - OUTPUT_D))).astype(jnp.bfloat16)
    b1f = b1.astype(jnp.float32)
    b2f = b2.astype(jnp.float32)
    b3f = jnp.pad(b3.astype(jnp.float32), ((0, 0), (0, OUT_PAD - OUTPUT_D)))

    full = lambda shape: pl.BlockSpec(shape, lambda i: (0, 0))

    flops = 2 * B_pad * (INPUT_D * MID_D + MID_D * EMB_D + EMB_D * OUT_PAD)
    bytes_accessed = (
        B_pad * INPUT_D * 2                                               # x (bf16)
        + (INPUT_D * MID_D + MID_D * EMB_D + EMB_D * OUT_PAD) * 2         # weights (bf16)
        + (MID_D + EMB_D + OUT_PAD) * 4                                   # biases (f32)
        + B_pad * (EMB_D + OUT_PAD) * 4)                                  # outputs (f32)

    emb, out_p = pl.pallas_call(
        _mlp_kernel,
        out_shape=(
            jax.ShapeDtypeStruct((B_pad, EMB_D), jnp.float32),
            jax.ShapeDtypeStruct((B_pad, OUT_PAD), jnp.float32),
        ),
        grid_spec=pltpu.PrefetchScalarGridSpec(
            num_scalar_prefetch=0,
            grid=grid,
            in_specs=[
                pl.BlockSpec((tb, INPUT_D), lambda i: (i, 0)),   # x tile
                full((INPUT_D, MID_D)),                          # w1 (resident)
                full((1, MID_D)),                                # b1
                full((MID_D, EMB_D)),                            # w2
                full((1, EMB_D)),                                # b2
                full((EMB_D, OUT_PAD)),                          # w3 (padded)
                full((1, OUT_PAD)),                              # b3 (padded)
            ],
            out_specs=[
                pl.BlockSpec((tb, EMB_D), lambda i: (i, 0)),
                pl.BlockSpec((tb, OUT_PAD), lambda i: (i, 0)),
            ],
        ),
        compiler_params=pltpu.CompilerParams(
            dimension_semantics=("parallel",),
            vmem_limit_bytes=48 * 1024 * 1024,   # safe on v7x's smaller VMEM
        ),
        cost_estimate=pl.CostEstimate(
            flops=flops, transcendentals=0, bytes_accessed=bytes_accessed),
    )(x_p, w1b, b1f, w2b, b2f, w3b, b3f)

    return emb[:B], out_p[:B, :OUTPUT_D]


def init_params(key):
    """Deterministic synthetic parameters (same shapes as the PyTorch module)."""
    ks = jax.random.split(key, 6)

    def lin(kw, kb, fan_in, fan_out):
        bound = 1.0 / jnp.sqrt(fan_in)
        w = jax.random.uniform(kw, (fan_in, fan_out), jnp.float32, -bound, bound)
        b = jax.random.uniform(kb, (1, fan_out), jnp.float32, -bound, bound)
        return w, b

    w1, b1 = lin(ks[0], ks[1], INPUT_D, MID_D)
    w2, b2 = lin(ks[2], ks[3], MID_D, EMB_D)
    w3, b3 = lin(ks[4], ks[5], EMB_D, OUTPUT_D)
    return (w1, b1, w2, b2, w3, b3)


if __name__ == "__main__":
    key = jax.random.PRNGKey(0)
    k_x, k_p = jax.random.split(key)

    B = 16  # small batch; wrapper pads/tiles as needed (grid of 2 x 8-row tiles)
    x = jax.random.normal(k_x, (B, INPUT_D), jnp.float32)
    params = init_params(k_p)

    emb, out = mlp_regressor_forward(x, params)
    jax.block_until_ready((emb, out))
    assert emb.shape == (B, EMB_D) and out.shape == (B, OUTPUT_D)

    w1, b1, w2, b2, w3, b3 = params

    # (1) Semantic reference: plain f32 math (same as the PyTorch forward).
    #     Loose tolerance because the kernel uses bf16 MXU inputs.
    h_f32 = jnp.maximum(x @ w1 + b1, 0.0)
    emb_f32 = h_f32 @ w2 + b2
    out_f32 = emb_f32 @ w3 + b3
    assert jnp.allclose(emb, emb_f32, atol=5e-2, rtol=5e-2)
    assert jnp.allclose(out, out_f32, atol=5e-2, rtol=5e-2)

    # (2) Tight reference mirroring the kernel's bf16-input / f32-accumulate math.
    bf = jnp.bfloat16
    h_m = jnp.maximum(
        jnp.dot(x.astype(bf), w1.astype(bf), preferred_element_type=jnp.float32) + b1, 0.0)
    emb_m = jnp.dot(h_m.astype(bf), w2.astype(bf),
                    preferred_element_type=jnp.float32) + b2
    out_m = jnp.dot(emb_m.astype(bf), w3.astype(bf),
                    preferred_element_type=jnp.float32) + b3
    assert jnp.allclose(emb, emb_m, atol=2e-3, rtol=2e-3)
    assert jnp.allclose(out, out_m, atol=2e-3, rtol=2e-3)

    print("KERNEL_OK")
</pallas_src>

<mosaic_0001>
module attributes {stable_mosaic.version = 11 : i64} {
  func.func @_mlp_kernel(%arg0: i32, %arg1: memref<8x29xbf16, #tpu.memory_space<vmem>>, %arg2: memref<29x256xbf16, #tpu.memory_space<vmem>>, %arg3: memref<1x256xf32, #tpu.memory_space<vmem>>, %arg4: memref<256x128xbf16, #tpu.memory_space<vmem>>, %arg5: memref<1x128xf32, #tpu.memory_space<vmem>>, %arg6: memref<128x128xbf16, #tpu.memory_space<vmem>>, %arg7: memref<1x128xf32, #tpu.memory_space<vmem>>, %arg8: memref<8x128xf32, #tpu.memory_space<vmem>>, %arg9: memref<8x128xf32, #tpu.memory_space<vmem>>) attributes {dimension_semantics = [#tpu.dimension_semantics<parallel>], iteration_bounds = array<i64: 2>, scalar_prefetch = 0 : i64, scratch_operands = 0 : i64, tpu.core_type = #tpu.core_type<tc>, window_params = [{transform_indices = @transform_0, window_bounds = array<i64: 8, 29>}, {pipeline_mode = #tpu.pipeline_mode<synchronous>, transform_indices = @transform_1, window_bounds = array<i64: 29, 256>}, {pipeline_mode = #tpu.pipeline_mode<synchronous>, transform_indices = @transform_2, window_bounds = array<i64: 1, 256>}, {pipeline_mode = #tpu.pipeline_mode<synchronous>, transform_indices = @transform_3, window_bounds = array<i64: 256, 128>}, {pipeline_mode = #tpu.pipeline_mode<synchronous>, transform_indices = @transform_4, window_bounds = array<i64: 1, 128>}, {pipeline_mode = #tpu.pipeline_mode<synchronous>, transform_indices = @transform_5, window_bounds = array<i64: 128, 128>}, {pipeline_mode = #tpu.pipeline_mode<synchronous>, transform_indices = @transform_6, window_bounds = array<i64: 1, 128>}, {transform_indices = @transform_7, window_bounds = array<i64: 8, 128>}, {transform_indices = @transform_8, window_bounds = array<i64: 8, 128>}]} {
    %c0 = arith.constant 0 : index
    %c0_0 = arith.constant 0 : index
    %0 = vector.load %arg1[%c0, %c0_0] : memref<8x29xbf16, #tpu.memory_space<vmem>>, vector<8x29xbf16>
    %c0_1 = arith.constant 0 : index
    %c0_2 = arith.constant 0 : index
    %1 = vector.load %arg2[%c0_1, %c0_2] : memref<29x256xbf16, #tpu.memory_space<vmem>>, vector<29x256xbf16>
    %cst = arith.constant dense<0.000000e+00> : vector<8x256xf32>
    %2 = tpu.matmul %0, %1, %cst {dimension_numbers = #tpu.dot_dimension_numbers<[1], [0], [0], [1], [0, 0, 1, 1], [], []>} : vector<8x29xbf16>, vector<29x256xbf16>, vector<8x256xf32> -> vector<8x256xf32>
    %c0_3 = arith.constant 0 : index
    %c0_4 = arith.constant 0 : index
    %3 = vector.load %arg3[%c0_3, %c0_4] : memref<1x256xf32, #tpu.memory_space<vmem>>, vector<1x256xf32>
    %4 = vector.broadcast %3 : vector<1x256xf32> to vector<8x256xf32>
    %5 = arith.addf %2, %4 : vector<8x256xf32>
    %cst_5 = arith.constant 0.000000e+00 : f32
    %6 = vector.broadcast %cst_5 : f32 to vector<8x256xf32>
    %7 = arith.maximumf %5, %6 : vector<8x256xf32>
    %8 = arith.truncf %7 : vector<8x256xf32> to vector<8x256xbf16>
    %c0_6 = arith.constant 0 : index
    %c0_7 = arith.constant 0 : index
    %9 = vector.load %arg4[%c0_6, %c0_7] : memref<256x128xbf16, #tpu.memory_space<vmem>>, vector<256x128xbf16>
    %cst_8 = arith.constant dense<0.000000e+00> : vector<8x128xf32>
    %10 = tpu.matmul %8, %9, %cst_8 {dimension_numbers = #tpu.dot_dimension_numbers<[1], [0], [0], [1], [0, 0, 1, 1], [], []>} : vector<8x256xbf16>, vector<256x128xbf16>, vector<8x128xf32> -> vector<8x128xf32>
    %c0_9 = arith.constant 0 : index
    %c0_10 = arith.constant 0 : index
    %11 = vector.load %arg5[%c0_9, %c0_10] : memref<1x128xf32, #tpu.memory_space<vmem>>, vector<1x128xf32>
    %12 = vector.broadcast %11 : vector<1x128xf32> to vector<8x128xf32>
    %13 = arith.addf %10, %12 : vector<8x128xf32>
    %14 = arith.truncf %13 : vector<8x128xf32> to vector<8x128xbf16>
    %c0_11 = arith.constant 0 : index
    %c0_12 = arith.constant 0 : index
    %15 = vector.load %arg6[%c0_11, %c0_12] : memref<128x128xbf16, #tpu.memory_space<vmem>>, vector<128x128xbf16>
    %cst_13 = arith.constant dense<0.000000e+00> : vector<8x128xf32>
    %16 = tpu.matmul %14, %15, %cst_13 {dimension_numbers = #tpu.dot_dimension_numbers<[1], [0], [0], [1], [0, 0, 1, 1], [], []>} : vector<8x128xbf16>, vector<128x128xbf16>, vector<8x128xf32> -> vector<8x128xf32>
    %c0_14 = arith.constant 0 : index
    %c0_15 = arith.constant 0 : index
    %17 = vector.load %arg7[%c0_14, %c0_15] : memref<1x128xf32, #tpu.memory_space<vmem>>, vector<1x128xf32>
    %18 = vector.broadcast %17 : vector<1x128xf32> to vector<8x128xf32>
    %19 = arith.addf %16, %18 : vector<8x128xf32>
    %c0_16 = arith.constant 0 : index
    %c0_17 = arith.constant 0 : index
    %20 = vector.load %arg8[%c0_16, %c0_17] : memref<8x128xf32, #tpu.memory_space<vmem>>, vector<8x128xf32>
    tpu.vector_store %arg8[%c0_16, %c0_17], %13 {strides = array<i32>} : memref<8x128xf32, #tpu.memory_space<vmem>>, vector<8x128xf32>,
    %c0_18 = arith.constant 0 : index
    %c0_19 = arith.constant 0 : index
    %21 = vector.load %arg9[%c0_18, %c0_19] : memref<8x128xf32, #tpu.memory_space<vmem>>, vector<8x128xf32>
    tpu.vector_store %arg9[%c0_18, %c0_19], %19 {strides = array<i32>} : memref<8x128xf32, #tpu.memory_space<vmem>>, vector<8x128xf32>,
    return
  }
  func.func @transform_0(%arg0: i32) -> (i32, i32) {
    %c0_i32 = arith.constant 0 : i32
    %c0_i32_0 = arith.constant 0 : i32
    return %arg0, %c0_i32 : i32, i32
  }
  func.func @transform_1(%arg0: i32) -> (i32, i32) {
    %c0_i32 = arith.constant 0 : i32
    %c0_i32_0 = arith.constant 0 : i32
    %c0_i32_1 = arith.constant 0 : i32
    return %c0_i32, %c0_i32_0 : i32, i32
  }
  func.func @transform_2(%arg0: i32) -> (i32, i32) {
    %c0_i32 = arith.constant 0 : i32
    %c0_i32_0 = arith.constant 0 : i32
    %c0_i32_1 = arith.constant 0 : i32
    return %c0_i32, %c0_i32_0 : i32, i32
  }
  func.func @transform_3(%arg0: i32) -> (i32, i32) {
    %c0_i32 = arith.constant 0 : i32
    %c0_i32_0 = arith.constant 0 : i32
    %c0_i32_1 = arith.constant 0 : i32
    return %c0_i32, %c0_i32_0 : i32, i32
  }
  func.func @transform_4(%arg0: i32) -> (i32, i32) {
    %c0_i32 = arith.constant 0 : i32
    %c0_i32_0 = arith.constant 0 : i32
    %c0_i32_1 = arith.constant 0 : i32
    return %c0_i32, %c0_i32_0 : i32, i32
  }
  func.func @transform_5(%arg0: i32) -> (i32, i32) {
    %c0_i32 = arith.constant 0 : i32
    %c0_i32_0 = arith.constant 0 : i32
    %c0_i32_1 = arith.constant 0 : i32
    return %c0_i32, %c0_i32_0 : i32, i32
  }
  func.func @transform_6(%arg0: i32) -> (i32, i32) {
    %c0_i32 = arith.constant 0 : i32
    %c0_i32_0 = arith.constant 0 : i32
    %c0_i32_1 = arith.constant 0 : i32
    return %c0_i32, %c0_i32_0 : i32, i32
  }
  func.func @transform_7(%arg0: i32) -> (i32, i32) {
    %c0_i32 = arith.constant 0 : i32
    %c0_i32_0 = arith.constant 0 : i32
    return %arg0, %c0_i32 : i32, i32
  }
  func.func @transform_8(%arg0: i32) -> (i32, i32) {
    %c0_i32 = arith.constant 0 : i32
    %c0_i32_0 = arith.constant 0 : i32
    return %arg0, %c0_i32 : i32, i32
  }
}

</mosaic_0001>

<llo_original>
// kernel: mlp_regressor_forward.1
$region0: #{mlp_regressor_forward.1}
  #allocation0 [shape = 'u32[]', space=smem, size = 0x4, offset = 0x4, fixed_abs, tag = 'smem constant byte address 0x4 - core index']
  #allocation1 [shape = 'u32[144,128]{1,0:T(1,128)}', space=vmem, size = 0x12000, scoped, tag = 'internal scratch']
  %s0 = inlined_call_operand.vmem [shape: bf16[16,29], index: 0, kind: input, shape index: {}]
  %s1 = inlined_call_operand.vmem [shape: bf16[29,256], index: 1, kind: input, shape index: {}]
  %s2 = inlined_call_operand.vmem [shape: f32[1,256], index: 2, kind: input, shape index: {}]
  %s3 = inlined_call_operand.vmem [shape: bf16[256,128], index: 3, kind: input, shape index: {}]
  %s4 = inlined_call_operand.vmem [shape: f32[1,128], index: 4, kind: input, shape index: {}]
  %s5 = inlined_call_operand.vmem [shape: bf16[128,128], index: 5, kind: input, shape index: {}]
  %s6 = inlined_call_operand.vmem [shape: f32[1,128], index: 6, kind: input, shape index: {}]
  %s7 = inlined_call_operand.hbm [shape: f32[16,128], index: 7, kind: output, shape index: {0}]
  %s8 = inlined_call_operand.hbm [shape: f32[16,128], index: 8, kind: output, shape index: {1}]
  %9 = xla_tuple %s7, %s8
  %s10 = sld [smem:[#allocation0]]
  $region69: #{mlp_regressor_forward.1} parent=0
    _
  %s12 = ssub.s32 1, %s10
  %s13 = scalar_select 0, %s12, %s10
  $region1: #{mlp_regressor_forward.1} parent=0
    #allocation2 [shape = 'u8[8192]{0}', space=vmem, size = 0x2000, scoped, tag = 'output window, operand 0']
    #allocation3 [shape = 's32[2]{0}', space=sflag, size = 0x8, scoped, tag = 'scoped memory for mlp_regressor_forward.1']
    #allocation4 [shape = 'u8[8192]{0}', space=vmem, size = 0x2000, scoped, tag = 'output window, operand 1']
    #allocation5 [shape = 's32[2]{0}', space=sflag, size = 0x8, scoped, tag = 'scoped memory for mlp_regressor_forward.1']
    %14 = vsyncpa [#allocation3], 0
    %s15 = scalar_lea.sflag [#allocation3], 1
    %16 = vsyncpa %s15, 0
    %17 = vsyncpa [#allocation5], 0
    %s18 = scalar_lea.sflag [#allocation5], 1
    %19 = vsyncpa %s18, 0
    loop: start=0, step=1, limit=4
    $region2: #{mlp_regressor_forward.1} parent=1 // loop_pre_header
      _
    $region3: #{mlp_regressor_forward.1} parent=1 // loop_header
      %s21 = sphi 0, %s25
      %p22 = scmp.ge.s32.totalorder %s21, 4
      %s31 = sphi 0, %s33
      %s34 = sphi 0, %s31
      %s35 = sphi 0, %s34
      %s51 = sphi 0, %s35
      %s55 = sphi 0, %s55
      %s57 = sphi 0, %s55
      %s58 = sphi 0, %s57
      %s72 = sphi 0, %s58
      %s76 = sphi 0, %s76
      %s78 = sphi 0, %s76
      %s79 = sphi 0, %s78
      %s93 = sphi 0, %s79
      %s97 = sphi 0, %s97
      %s99 = sphi 0, %s97
      %s100 = sphi 0, %s99
      %s114 = sphi 0, %s100
      %s118 = sphi 0, %s118
      %s120 = sphi 0, %s118
      %s121 = sphi 0, %s120
      %s135 = sphi 0, %s121
      %s139 = sphi 0, %s139
      %s141 = sphi 0, %s139
      %s142 = sphi 0, %s141
      %s156 = sphi 0, %s142
      %s160 = sphi 0, %s160
      %s162 = sphi 0, %s160
      %s163 = sphi 0, %s162
      %s177 = sphi 0, %s163
      %s183 = sphi 0, %s185
      %s186 = sphi 0, %s183
      %s187 = sphi 0, %s186
      %s203 = sphi 0, %s187
      %s209 = sphi 0, %s211
      %s212 = sphi 0, %s209
      %s213 = sphi 0, %s212
      %s229 = sphi 0, %s213
    $region4: #{mlp_regressor_forward.1} parent=1 // loop_header_branch
      %24 = sbr.rel (%p22) target = $region8
    $region5: #{mlp_regressor_forward.1} parent=1 // loop_body
      %s26 = ssub.s32 %s21, 1
      %s27 = ssub.s32 %s21, 2
      %s28 = sadd.s32 %s21, 1
      %s29 = ssub.s32 %s21, %s28
      %p30 = scmp.eq.s32.totalorder %s29, 0
      %s32 = sadd.s32 %s31, 1
      %s33 = scalar_select %p30, %s31, %s32
      %p36 = pneg %p30
      %p37 = scmp.eq.s32.totalorder %s21, 1
      %p38 = por %p36, %p37
      %p39 = scmp.ne.s32.totalorder %s31, %s34
      %p40 = scmp.eq.s32.totalorder %s21, 0
      %p41 = por %p39, %p40
      %p42 = scmp.ne.s32.totalorder %s31, %s34
      %p43 = scmp.eq.s32.totalorder %s26, 1
      %p44 = por %p42, %p43
      %p45 = scmp.ne.s32.totalorder %s34, %s35
      %p46 = scmp.eq.s32.totalorder %s26, 0
      %p47 = por %p45, %p46
      %p48 = scmp.ne.s32.totalorder %s34, %s35
      %p49 = scmp.eq.s32.totalorder %s27, 1
      %p50 = por %p48, %p49
      %p52 = scmp.ne.s32.totalorder %s35, %s51
      %p53 = scmp.eq.s32.totalorder %s27, 0
      %p54 = por %p52, %p53
      %s56 = sadd.s32 %s55, 1
      %p59 = scmp.eq.s32.totalorder %s21, 1
      %p60 = scmp.ne.s32.totalorder %s55, %s57
      %p61 = scmp.eq.s32.totalorder %s21, 0
      %p62 = por %p60, %p61
      %p63 = scmp.ne.s32.totalorder %s55, %s57
      %p64 = scmp.eq.s32.totalorder %s26, 1
      %p65 = por %p63, %p64
      %p66 = scmp.ne.s32.totalorder %s57, %s58
      %p67 = scmp.eq.s32.totalorder %s26, 0
      %p68 = por %p66, %p67
      %p69 = scmp.ne.s32.totalorder %s57, %s58
      %p70 = scmp.eq.s32.totalorder %s27, 1
      %p71 = por %p69, %p70
      %p73 = scmp.ne.s32.totalorder %s58, %s72
      %p74 = scmp.eq.s32.totalorder %s27, 0
      %p75 = por %p73, %p74
      %s77 = sadd.s32 %s76, 1
      %p80 = scmp.eq.s32.totalorder %s21, 1
      %p81 = scmp.ne.s32.totalorder %s76, %s78
      %p82 = scmp.eq.s32.totalorder %s21, 0
      %p83 = por %p81, %p82
      %p84 = scmp.ne.s32.totalorder %s76, %s78
      %p85 = scmp.eq.s32.totalorder %s26, 1
      %p86 = por %p84, %p85
      %p87 = scmp.ne.s32.totalorder %s78, %s79
      %p88 = scmp.eq.s32.totalorder %s26, 0
      %p89 = por %p87, %p88
      %p90 = scmp.ne.s32.totalorder %s78, %s79
      %p91 = scmp.eq.s32.totalorder %s27, 1
      %p92 = por %p90, %p91
      %p94 = scmp.ne.s32.totalorder %s79, %s93
      %p95 = scmp.eq.s32.totalorder %s27, 0
      %p96 = por %p94, %p95
      %s98 = sadd.s32 %s97, 1
      %p101 = scmp.eq.s32.totalorder %s21, 1
      %p102 = scmp.ne.s32.totalorder %s97, %s99
      %p103 = scmp.eq.s32.totalorder %s21, 0
      %p104 = por %p102, %p103
      %p105 = scmp.ne.s32.totalorder %s97, %s99
      %p106 = scmp.eq.s32.totalorder %s26, 1
      %p107 = por %p105, %p106
      %p108 = scmp.ne.s32.totalorder %s99, %s100
      %p109 = scmp.eq.s32.totalorder %s26, 0
      %p110 = por %p108, %p109
      %p111 = scmp.ne.s32.totalorder %s99, %s100
      %p112 = scmp.eq.s32.totalorder %s27, 1
      %p113 = por %p111, %p112
      %p115 = scmp.ne.s32.totalorder %s100, %s114
      %p116 = scmp.eq.s32.totalorder %s27, 0
      %p117 = por %p115, %p116
      %s119 = sadd.s32 %s118, 1
      %p122 = scmp.eq.s32.totalorder %s21, 1
      %p123 = scmp.ne.s32.totalorder %s118, %s120
      %p124 = scmp.eq.s32.totalorder %s21, 0
      %p125 = por %p123, %p124
      %p126 = scmp.ne.s32.totalorder %s118, %s120
      %p127 = scmp.eq.s32.totalorder %s26, 1
      %p128 = por %p126, %p127
      %p129 = scmp.ne.s32.totalorder %s120, %s121
      %p130 = scmp.eq.s32.totalorder %s26, 0
      %p131 = por %p129, %p130
      %p132 = scmp.ne.s32.totalorder %s120, %s121
      %p133 = scmp.eq.s32.totalorder %s27, 1
      %p134 = por %p132, %p133
      %p136 = scmp.ne.s32.totalorder %s121, %s135
      %p137 = scmp.eq.s32.totalorder %s27, 0
      %p138 = por %p136, %p137
      %s140 = sadd.s32 %s139, 1
      %p143 = scmp.eq.s32.totalorder %s21, 1
      %p144 = scmp.ne.s32.totalorder %s139, %s141
      %p145 = scmp.eq.s32.totalorder %s21, 0
      %p146 = por %p144, %p145
      %p147 = scmp.ne.s32.totalorder %s139, %s141
      %p148 = scmp.eq.s32.totalorder %s26, 1
      %p149 = por %p147, %p148
      %p150 = scmp.ne.s32.totalorder %s141, %s142
      %p151 = scmp.eq.s32.totalorder %s26, 0
      %p152 = por %p150, %p151
      %p153 = scmp.ne.s32.totalorder %s141, %s142
      %p154 = scmp.eq.s32.totalorder %s27, 1
      %p155 = por %p153, %p154
      %p157 = scmp.ne.s32.totalorder %s142, %s156
      %p158 = scmp.eq.s32.totalorder %s27, 0
      %p159 = por %p157, %p158
      %s161 = sadd.s32 %s160, 1
      %p164 = scmp.eq.s32.totalorder %s21, 1
      %p165 = scmp.ne.s32.totalorder %s160, %s162
      %p166 = scmp.eq.s32.totalorder %s21, 0
      %p167 = por %p165, %p166
      %p168 = scmp.ne.s32.totalorder %s160, %s162
      %p169 = scmp.eq.s32.totalorder %s26, 1
      %p170 = por %p168, %p169
      %p171 = scmp.ne.s32.totalorder %s162, %s163
      %p172 = scmp.eq.s32.totalorder %s26, 0
      %p173 = por %p171, %p172
      %p174 = scmp.ne.s32.totalorder %s162, %s163
      %p175 = scmp.eq.s32.totalorder %s27, 1
      %p176 = por %p174, %p175
      %p178 = scmp.ne.s32.totalorder %s163, %s177
      %p179 = scmp.eq.s32.totalorder %s27, 0
      %p180 = por %p178, %p179
      %s181 = ssub.s32 %s21, %s28
      %p182 = scmp.eq.s32.totalorder %s181, 0
      %s184 = sadd.s32 %s183, 1
      %s185 = scalar_select %p182, %s183, %s184
      %p188 = pneg %p182
      %p189 = scmp.eq.s32.totalorder %s21, 1
      %p190 = por %p188, %p189
      %p191 = scmp.ne.s32.totalorder %s183, %s186
      %p192 = scmp.eq.s32.totalorder %s21, 0
      %p193 = por %p191, %p192
      %p194 = scmp.ne.s32.totalorder %s183, %s186
      %p195 = scmp.eq.s32.totalorder %s26, 1
      %p196 = por %p194, %p195
      %p197 = scmp.ne.s32.totalorder %s186, %s187
      %p198 = scmp.eq.s32.totalorder %s26, 0
      %p199 = por %p197, %p198
      %p200 = scmp.ne.s32.totalorder %s186, %s187
      %p201 = scmp.eq.s32.totalorder %s27, 1
      %p202 = por %p200, %p201
      %p204 = scmp.ne.s32.totalorder %s187, %s203
      %p205 = scmp.eq.s32.totalorder %s27, 0
      %p206 = por %p204, %p205
      %s207 = ssub.s32 %s21, %s28
      %p208 = scmp.eq.s32.totalorder %s207, 0
      %s210 = sadd.s32 %s209, 1
      %s211 = scalar_select %p208, %s209, %s210
      %p214 = pneg %p208
      %p215 = scmp.eq.s32.totalorder %s21, 1
      %p216 = por %p214, %p215
      %p217 = scmp.ne.s32.totalorder %s209, %s212
      %p218 = scmp.eq.s32.totalorder %s21, 0
      %p219 = por %p217, %p218
      %p220 = scmp.ne.s32.totalorder %s209, %s212
      %p221 = scmp.eq.s32.totalorder %s26, 1
      %p222 = por %p220, %p221
      %p223 = scmp.ne.s32.totalorder %s212, %s213
      %p224 = scmp.eq.s32.totalorder %s26, 0
      %p225 = por %p223, %p224
      %p226 = scmp.ne.s32.totalorder %s212, %s213
      %p227 = scmp.eq.s32.totalorder %s27, 1
      %p228 = por %p226, %p227
      %p230 = scmp.ne.s32.totalorder %s213, %s229
      %p231 = scmp.eq.s32.totalorder %s27, 0
      %p232 = por %p230, %p231
      %p233 = scmp.le.s32.totalorder 1, %s21
      %p234 = scmp.lt.s32.totalorder %s21, 3
      %p235 = pnand %p233, %p234
      %p236 = pneg %p235
      // Predicated region
      $region9: #{mlp_regressor_forward.1} parent=5 // pred_check
        _
      $region10: #{mlp_regressor_forward.1} parent=5 // pred_check_branch
        %238 = sbr.rel (%p235) target = $region12
      $region11: #{mlp_regressor_forward.1} parent=5 // pred_region
        %s239 = ssub.s32 %s21, 1
        // Predicated region
        $region13: #{mlp_regressor_forward.1} parent=11 // pred_check
          %p240 = pneg %p68
        $region14: #{mlp_regressor_forward.1} parent=11 // pred_check_branch
          %242 = sbr.rel (%p240) target = $region16
        $region15: #{mlp_regressor_forward.1} parent=11 // pred_region
          _
        $region16: #{mlp_regressor_forward.1} parent=11 // pred_fallthru
          _
        // Predicated region
        $region17: #{mlp_regressor_forward.1} parent=11 // pred_check
          %p243 = pneg %p89
        $region18: #{mlp_regressor_forward.1} parent=11 // pred_check_branch
          %245 = sbr.rel (%p243) target = $region20
        $region19: #{mlp_regressor_forward.1} parent=11 // pred_region
          _
        $region20: #{mlp_regressor_forward.1} parent=11 // pred_fallthru
          _
        // Predicated region
        $region21: #{mlp_regressor_forward.1} parent=11 // pred_check
          %p246 = pneg %p110
        $region22: #{mlp_regressor_forward.1} parent=11 // pred_check_branch
          %248 = sbr.rel (%p246) target = $region24
        $region23: #{mlp_regressor_forward.1} parent=11 // pred_region
          _
        $region24: #{mlp_regressor_forward.1} parent=11 // pred_fallthru
          _
        // Predicated region
        $region25: #{mlp_regressor_forward.1} parent=11 // pred_check
          %p249 = pneg %p131
        $region26: #{mlp_regressor_forward.1} parent=11 // pred_check_branch
          %251 = sbr.rel (%p249) target = $region28
        $region27: #{mlp_regressor_forward.1} parent=11 // pred_region
          _
        $region28: #{mlp_regressor_forward.1} parent=11 // pred_fallthru
          _
        // Predicated region
        $region29: #{mlp_regressor_forward.1} parent=11 // pred_check
          %p252 = pneg %p152
        $region30: #{mlp_regressor_forward.1} parent=11 // pred_check_branch
          %254 = sbr.rel (%p252) target = $region32
        $region31: #{mlp_regressor_forward.1} parent=11 // pred_region
          _
        $region32: #{mlp_regressor_forward.1} parent=11 // pred_fallthru
          _
        // Predicated region
        $region33: #{mlp_regressor_forward.1} parent=11 // pred_check
          %p255 = pneg %p173
        $region34: #{mlp_regressor_forward.1} parent=11 // pred_check_branch
          %257 = sbr.rel (%p255) target = $region36
        $region35: #{mlp_regressor_forward.1} parent=11 // pred_region
          _
        $region36: #{mlp_regressor_forward.1} parent=11 // pred_fallthru
          _
      $region12: #{mlp_regressor_forward.1} parent=5 // pred_fallthru
        _
      %p258 = scmp.lt.s32.totalorder %s21, 2
      // Predicated region
      $region37: #{mlp_regressor_forward.1} parent=5 // pred_check
        %p259 = pneg %p258
      $region38: #{mlp_regressor_forward.1} parent=5 // pred_check_branch
        %261 = sbr.rel (%p259) target = $region40
      $region39: #{mlp_regressor_forward.1} parent=5 // pred_region
        // Predicated region
        $region41: #{mlp_regressor_forward.1} parent=39 // pred_check
          %p262 = pneg %p41
        $region42: #{mlp_regressor_forward.1} parent=39 // pred_check_branch
          %264 = sbr.rel (%p262) target = $region44
        $region43: #{mlp_regressor_forward.1} parent=39 // pred_region
          %p265 = scmp.lt.s32.totalorder %s21, 1
          %s266 = scalar_select %p265, %s21, 1
          %s267 = smul.addr %s266, 4
          %s268 = scalar_lea.vmem %s0, %s267
        $region44: #{mlp_regressor_forward.1} parent=39 // pred_fallthru
          _
      $region40: #{mlp_regressor_forward.1} parent=5 // pred_fallthru
        _
      %p269 = scmp.le.s32.totalorder 1, %s21
      %p270 = scmp.lt.s32.totalorder %s21, 3
      %p271 = pnand %p269, %p270
      %p272 = pneg %p271
      // Predicated region
      $region45: #{mlp_regressor_forward.1} parent=5 // pred_check
        _
      $region46: #{mlp_regressor_forward.1} parent=5 // pred_check_branch
        %274 = sbr.rel (%p271) target = $region48
      $region47: #{mlp_regressor_forward.1} parent=5 // pred_region
        %s275 = ssub.s32 %s21, 1
        %p276 = scmp.lt.s32.totalorder %s26, 1
        %s277 = scalar_select %p276, %s26, 1
        %s278 = smul.addr %s277, 4
        %s279 = scalar_lea.vmem %s0, %s278
        %p280 = pneg %p47
        %p281 = pneg %p44
        %p282 = pneg %p68
        %p283 = pneg %p65
        %p284 = pneg %p89
        %p285 = pneg %p86
        %p286 = pneg %p110
        %p287 = pneg %p107
        %p288 = pneg %p131
        %p289 = pneg %p128
        %p290 = pneg %p152
        %p291 = pneg %p149
        %p292 = pneg %p173
        %p293 = pneg %p170
        %p294 = pneg %p199
        %p295 = pneg %p196
        %s296 = sand.u32 %s186, 1
        %s297 = scalar_lea.sflag [#allocation3], %s296
        %s298 = sand.u32 %s186, 1
        %s299 = smul.addr %s298, 8
        %s300 = scalar_lea.vmem [#allocation2], %s299
        %p301 = pneg %p225
        %p302 = pneg %p222
        %s303 = sand.u32 %s212, 1
        %s304 = scalar_lea.sflag [#allocation5], %s303
        %s305 = sand.u32 %s212, 1
        %s306 = smul.addr %s305, 8
        %s307 = scalar_lea.vmem [#allocation4], %s306
        %p308 = scmp.lt.s32.totalorder %s26, 1
        %s309 = scalar_select %p308, %s26, 1
        %s310 = smul.addr %s309, 4
        %s311 = scalar_lea.vmem %s0, %s310
        %v313 = vld [vmem:[%s311] sm:$0xf]
        %v314 = vld [vmem:[%s1] sm:$0xff]
        %v315 = vld [vmem:[%s1 + $0x8] sm:$0xff]
        %v316 = vld [vmem:[%s1 + $0x10] sm:$0xff]
        %v317 = vld [vmem:[%s1 + $0x18] sm:$0x77]
        %v318 = vld [vmem:[%s2] sm:$0x3]
        %v320 = vlaneseq
        %v321 = vshrl.u32 %v320, 7
        %v322 = vsub.s32 0, %v321
        %v323 = vrot.slane %v318, %v322
        %v324 = vlaneseq
        %v325 = vshrl.u32 %v324, 7
        %v326 = vsub.s32 1, %v325
        %v327 = vrot.slane %v318, %v326
        %v334 = vunpack.c.l.b16 %v314
        %v335 = vunpack.c.h.b16 %v314
        %v336 = vunpack.c.l.b16 %v315
        %v337 = vunpack.c.h.b16 %v315
        %v338 = vunpack.c.l.b16 %v316
        %v339 = vunpack.c.h.b16 %v316
        %v340 = vunpack.c.l.b16 %v317
        %v341 = vunpack.c.h.b16 %v317
        %v342 = vpack.c.b16 %v336, %v334
        %v343 = vpack.c.b16 %v337, %v335
        %v344 = vpack.c.b16 %v340, %v338
        %v345 = vpack.c.b16 %v341, %v339
        %vm348 = vcmask 236544
        %v350 = vsel %vm348, %v313, 0
        %vm352 = vcmask 1045504
        %vm353 = vcmask 1046528
        %v354 = vsel %vm352, 4294967295, 65535
        %v355 = vsel %vm353, %v354, 0
        %v357 = vand.u32 %v344, %v355
        %v360 = vand.u32 %v345, %v355
        %362 = vmatprep.subr.bf16.mxu0 0
        %363 = vmatpush1.bf16.msra.mxu0 0
        %364 = vmatprep.subr.bf16.mxu0 0
        %365 = vmatpush1.bf16.msra.mxu0 0
        %366 = vmatprep.subr.bf16.mxu0 0
        %367 = vmatpush1.bf16.msra.mxu0 0
        %368 = vmatprep.subr.bf16.mxu0 0
        %369 = vmatpush1.bf16.msra.mxu0 0
        %370 = vmatprep.subr.bf16.mxu0 0
        %371 = vmatpush1.bf16.msra.mxu0 0
        %372 = vmatprep.subr.bf16.mxu0 0
        %373 = vmatpush1.bf16.msra.mxu0 0
        %374 = vmatprep.subr.bf16.mxu0 %v360
        %375 = vmatpush1.bf16.msra.mxu0 %v357
        %376 = vmatprep.subr.bf16.mxu0 %v343
        %377 = vmatpush1.bf16.msra.mxu0 %v342
        %378 = vmatprep.subr.bf16.mxu0 0
        %379 = vmatpush2.bf16.msra.mxu0 0
        %380 = vmatprep.subr.bf16.mxu0 0
        %381 = vmatpush2.bf16.msra.mxu0 0
        %382 = vmatprep.subr.bf16.mxu0 0
        %383 = vmatpush2.bf16.msra.mxu0 0
        %384 = vmatprep.subr.bf16.mxu0 0
        %385 = vmatpush2.bf16.msra.mxu0 0
        %386 = vmatprep.subr.bf16.mxu0 0
        %387 = vmatpush2.bf16.msra.mxu0 0
        %388 = vmatprep.subr.bf16.mxu0 0
        %389 = vmatpush2.bf16.msra.mxu0 0
        %390 = vmatprep.subr.bf16.mxu0 0
        %391 = vmatpush2.bf16.msra.mxu0 0
        %392 = vmatprep.subr.bf16.mxu0 0
        %393 = vmatpush2.bf16.msra.mxu0 0
        %394 = vmatprep.mubr.bf16.mxu0 0
        %395 = vmatmul.mubr.bf16.gmra.mxu0 %v350
        %v396 = vpop.f32.mrf.mxu0
        %v397 = vadd.f32 %v323, %v396
        %v398 = vpop.f32.mrf.mxu0
        %v399 = vadd.f32 %v327, %v398
        %v400 = vpop.f32.mrf.mxu0
        %v401 = vpop.f32.mrf.mxu0
        %402 = vdwg.mxu0
        %v403 = vmax.f32 %v397, 0.0
        %v404 = vmax.f32 %v399, 0.0
        %v405 = vpack.c.bf16 %v403, %v403
        %v406 = vpack.c.bf16 %v404, %v404
        %v407 = vld [vmem:[%s3] sm:$0xf]
        %v408 = vld [vmem:[%s3 + $0x4] sm:$0xf]
        %v409 = vld [vmem:[%s3 + $0x8] sm:$0xf]
        %v410 = vld [vmem:[%s3 + $0xc] sm:$0xf]
        %v411 = vld [vmem:[%s3 + $0x10] sm:$0xf]
        %v412 = vld [vmem:[%s3 + $0x14] sm:$0xf]
        %v413 = vld [vmem:[%s3 + $0x18] sm:$0xf]
        %v414 = vld [vmem:[%s3 + $0x1c] sm:$0xf]
        %v415 = vld [vmem:[%s3 + $0x20] sm:$0xf]
        %v416 = vld [vmem:[%s3 + $0x24] sm:$0xf]
        %v417 = vld [vmem:[%s3 + $0x28] sm:$0xf]
        %v418 = vld [vmem:[%s3 + $0x2c] sm:$0xf]
        %v419 = vld [vmem:[%s3 + $0x30] sm:$0xf]
        %v420 = vld [vmem:[%s3 + $0x34] sm:$0xf]
        %v421 = vld [vmem:[%s3 + $0x38] sm:$0xf]
        %v422 = vld [vmem:[%s3 + $0x3c] sm:$0xf]
        %v423 = vld [vmem:[%s3 + $0x40] sm:$0xf]
        %v424 = vld [vmem:[%s3 + $0x44] sm:$0xf]
        %v425 = vld [vmem:[%s3 + $0x48] sm:$0xf]
        %v426 = vld [vmem:[%s3 + $0x4c] sm:$0xf]
        %v427 = vld [vmem:[%s3 + $0x50] sm:$0xf]
        %v428 = vld [vmem:[%s3 + $0x54] sm:$0xf]
        %v429 = vld [vmem:[%s3 + $0x58] sm:$0xf]
        %v430 = vld [vmem:[%s3 + $0x5c] sm:$0xf]
        %v431 = vld [vmem:[%s3 + $0x60] sm:$0xf]
        %v432 = vld [vmem:[%s3 + $0x64] sm:$0xf]
        %v433 = vld [vmem:[%s3 + $0x68] sm:$0xf]
        %v434 = vld [vmem:[%s3 + $0x6c] sm:$0xf]
        %v435 = vld [vmem:[%s3 + $0x70] sm:$0xf]
        %v436 = vld [vmem:[%s3 + $0x74] sm:$0xf]
        %v437 = vld [vmem:[%s3 + $0x78] sm:$0xf]
        %v438 = vld [vmem:[%s3 + $0x7c] sm:$0xf]
        %v439 = vld [vmem:[%s4] sm:$0x1]
        %v441 = vlaneseq
        %v442 = vshrl.u32 %v441, 7
        %v443 = vsub.s32 0, %v442
        %v444 = vrot.slane %v439, %v443
        %v478 = vunpack.c.l.b16 %v407
        %v479 = vunpack.c.l.b16 %v408
        %v480 = vunpack.c.l.b16 %v409
        %v481 = vunpack.c.l.b16 %v410
        %v482 = vunpack.c.l.b16 %v411
        %v483 = vunpack.c.l.b16 %v412
        %v484 = vunpack.c.l.b16 %v413
        %v485 = vunpack.c.l.b16 %v414
        %v486 = vunpack.c.l.b16 %v415
        %v487 = vunpack.c.l.b16 %v416
        %v488 = vunpack.c.l.b16 %v417
        %v489 = vunpack.c.l.b16 %v418
        %v490 = vunpack.c.l.b16 %v419
        %v491 = vunpack.c.l.b16 %v420
        %v492 = vunpack.c.l.b16 %v421
        %v493 = vunpack.c.l.b16 %v422
        %v494 = vunpack.c.l.b16 %v423
        %v495 = vunpack.c.l.b16 %v424
        %v496 = vunpack.c.l.b16 %v425
        %v497 = vunpack.c.l.b16 %v426
        %v498 = vunpack.c.l.b16 %v427
        %v499 = vunpack.c.l.b16 %v428
        %v500 = vunpack.c.l.b16 %v429
        %v501 = vunpack.c.l.b16 %v430
        %v502 = vunpack.c.l.b16 %v431
        %v503 = vunpack.c.l.b16 %v432
        %v504 = vunpack.c.l.b16 %v433
        %v505 = vunpack.c.l.b16 %v434
        %v506 = vunpack.c.l.b16 %v435
        %v507 = vunpack.c.l.b16 %v436
        %v508 = vunpack.c.l.b16 %v437
        %v509 = vunpack.c.l.b16 %v438
        %v510 = vpack.c.b16 %v479, %v478
        %v511 = vpack.c.b16 %v481, %v480
        %v512 = vpack.c.b16 %v483, %v482
        %v513 = vpack.c.b16 %v485, %v484
        %v514 = vpack.c.b16 %v487, %v486
        %v515 = vpack.c.b16 %v489, %v488
        %v516 = vpack.c.b16 %v491, %v490
        %v517 = vpack.c.b16 %v493, %v492
        %v518 = vpack.c.b16 %v495, %v494
        %v519 = vpack.c.b16 %v497, %v496
        %v520 = vpack.c.b16 %v499, %v498
        %v521 = vpack.c.b16 %v501, %v500
        %v522 = vpack.c.b16 %v503, %v502
        %v523 = vpack.c.b16 %v505, %v504
        %v524 = vpack.c.b16 %v507, %v506
        %v525 = vpack.c.b16 %v509, %v508
        %542 = vmatprep.subr.bf16.mxu0 0
        %543 = vmatpush1.bf16.msra.mxu0 %v517
        %544 = vmatprep.subr.bf16.mxu0 0
        %545 = vmatpush1.bf16.msra.mxu0 %v516
        %546 = vmatprep.subr.bf16.mxu0 0
        %547 = vmatpush1.bf16.msra.mxu0 %v515
        %548 = vmatprep.subr.bf16.mxu0 0
        %549 = vmatpush1.bf16.msra.mxu0 %v514
        %550 = vmatprep.subr.bf16.mxu0 0
        %551 = vmatpush1.bf16.msra.mxu0 %v513
        %552 = vmatprep.subr.bf16.mxu0 0
        %553 = vmatpush1.bf16.msra.mxu0 %v512
        %554 = vmatprep.subr.bf16.mxu0 0
        %555 = vmatpush1.bf16.msra.mxu0 %v511
        %556 = vmatprep.subr.bf16.mxu0 0
        %557 = vmatpush1.bf16.msra.mxu0 %v510
        %558 = vmatprep.subr.bf16.mxu0 0
        %559 = vmatpush2.bf16.msra.mxu0 %v525
        %560 = vmatprep.subr.bf16.mxu0 0
        %561 = vmatpush2.bf16.msra.mxu0 %v524
        %562 = vmatprep.subr.bf16.mxu0 0
        %563 = vmatpush2.bf16.msra.mxu0 %v523
        %564 = vmatprep.subr.bf16.mxu0 0
        %565 = vmatpush2.bf16.msra.mxu0 %v522
        %566 = vmatprep.subr.bf16.mxu0 0
        %567 = vmatpush2.bf16.msra.mxu0 %v521
        %568 = vmatprep.subr.bf16.mxu0 0
        %569 = vmatpush2.bf16.msra.mxu0 %v520
        %570 = vmatprep.subr.bf16.mxu0 0
        %571 = vmatpush2.bf16.msra.mxu0 %v519
        %572 = vmatprep.subr.bf16.mxu0 0
        %573 = vmatpush2.bf16.msra.mxu0 %v518
        %574 = vmatprep.mubr.bf16.mxu0 %v406
        %575 = vmatmul.mubr.bf16.gmra.mxu0 %v405
        %v576 = vpop.f32.mrf.mxu0
        %v577 = vadd.f32 %v444, %v576
        %v578 = vpop.f32.mrf.mxu0
        %v579 = vpop.f32.mrf.mxu0
        %v580 = vpop.f32.mrf.mxu0
        %581 = vdwg.mxu0
        %v582 = vpack.c.bf16 %v577, %v577
        %v583 = vld [vmem:[%s5] sm:$0xf]
        %v584 = vld [vmem:[%s5 + $0x4] sm:$0xf]
        %v585 = vld [vmem:[%s5 + $0x8] sm:$0xf]
        %v586 = vld [vmem:[%s5 + $0xc] sm:$0xf]
        %v587 = vld [vmem:[%s5 + $0x10] sm:$0xf]
        %v588 = vld [vmem:[%s5 + $0x14] sm:$0xf]
        %v589 = vld [vmem:[%s5 + $0x18] sm:$0xf]
        %v590 = vld [vmem:[%s5 + $0x1c] sm:$0xf]
        %v591 = vld [vmem:[%s5 + $0x20] sm:$0xf]
        %v592 = vld [vmem:[%s5 + $0x24] sm:$0xf]
        %v593 = vld [vmem:[%s5 + $0x28] sm:$0xf]
        %v594 = vld [vmem:[%s5 + $0x2c] sm:$0xf]
        %v595 = vld [vmem:[%s5 + $0x30] sm:$0xf]
        %v596 = vld [vmem:[%s5 + $0x34] sm:$0xf]
        %v597 = vld [vmem:[%s5 + $0x38] sm:$0xf]
        %v598 = vld [vmem:[%s5 + $0x3c] sm:$0xf]
        %v599 = vld [vmem:[%s6] sm:$0x1]
        %v601 = vlaneseq
        %v602 = vshrl.u32 %v601, 7
        %v603 = vsub.s32 0, %v602
        %v604 = vrot.slane %v599, %v603
        %v622 = vunpack.c.l.b16 %v583
        %v623 = vunpack.c.l.b16 %v584
        %v624 = vunpack.c.l.b16 %v585
        %v625 = vunpack.c.l.b16 %v586
        %v626 = vunpack.c.l.b16 %v587
        %v627 = vunpack.c.l.b16 %v588
        %v628 = vunpack.c.l.b16 %v589
        %v629 = vunpack.c.l.b16 %v590
        %v630 = vunpack.c.l.b16 %v591
        %v631 = vunpack.c.l.b16 %v592
        %v632 = vunpack.c.l.b16 %v593
        %v633 = vunpack.c.l.b16 %v594
        %v634 = vunpack.c.l.b16 %v595
        %v635 = vunpack.c.l.b16 %v596
        %v636 = vunpack.c.l.b16 %v597
        %v637 = vunpack.c.l.b16 %v598
        %v638 = vpack.c.b16 %v623, %v622
        %v639 = vpack.c.b16 %v625, %v624
        %v640 = vpack.c.b16 %v627, %v626
        %v641 = vpack.c.b16 %v629, %v628
        %v642 = vpack.c.b16 %v631, %v630
        %v643 = vpack.c.b16 %v633, %v632
        %v644 = vpack.c.b16 %v635, %v634
        %v645 = vpack.c.b16 %v637, %v636
        %654 = vmatprep.subr.bf16.mxu0 0
        %655 = vmatpush1.bf16.msra.mxu0 %v645
        %656 = vmatprep.subr.bf16.mxu0 0
        %657 = vmatpush1.bf16.msra.mxu0 %v644
        %658 = vmatprep.subr.bf16.mxu0 0
        %659 = vmatpush1.bf16.msra.mxu0 %v643
        %660 = vmatprep.subr.bf16.mxu0 0
        %661 = vmatpush1.bf16.msra.mxu0 %v642
        %662 = vmatprep.subr.bf16.mxu0 0
        %663 = vmatpush1.bf16.msra.mxu0 %v641
        %664 = vmatprep.subr.bf16.mxu0 0
        %665 = vmatpush1.bf16.msra.mxu0 %v640
        %666 = vmatprep.subr.bf16.mxu0 0
        %667 = vmatpush1.bf16.msra.mxu0 %v639
        %668 = vmatprep.subr.bf16.mxu0 0
        %669 = vmatpush1.bf16.msra.mxu0 %v638
        %670 = vmatprep.subr.bf16.mxu0 0
        %671 = vmatpush2.bf16.msra.mxu0 0
        %672 = vmatprep.subr.bf16.mxu0 0
        %673 = vmatpush2.bf16.msra.mxu0 0
        %674 = vmatprep.subr.bf16.mxu0 0
        %675 = vmatpush2.bf16.msra.mxu0 0
        %676 = vmatprep.subr.bf16.mxu0 0
        %677 = vmatpush2.bf16.msra.mxu0 0
        %678 = vmatprep.subr.bf16.mxu0 0
        %679 = vmatpush2.bf16.msra.mxu0 0
        %680 = vmatprep.subr.bf16.mxu0 0
        %681 = vmatpush2.bf16.msra.mxu0 0
        %682 = vmatprep.subr.bf16.mxu0 0
        %683 = vmatpush2.bf16.msra.mxu0 0
        %684 = vmatprep.subr.bf16.mxu0 0
        %685 = vmatpush2.bf16.msra.mxu0 0
        %686 = vmatprep.mubr.bf16.mxu0 0
        %687 = vmatmul.mubr.bf16.gmra.mxu0 %v582
        %v688 = vpop.f32.mrf.mxu0
        %v689 = vadd.f32 %v604, %v688
        %v690 = vpop.f32.mrf.mxu0
        %v691 = vpop.f32.mrf.mxu0
        %v692 = vpop.f32.mrf.mxu0
        %693 = vdwg.mxu0
        %694 = vst [vmem:[%s300] sm:$0xff] %v577
        %695 = vst [vmem:[%s307] sm:$0xff] %v689
        %s696 = sand.u32 %s186, 1
        %s697 = scalar_lea.sflag [#allocation3], %s696
        %s698 = sand.u32 %s186, 1
        %s699 = smul.addr %s698, 8
        %s700 = scalar_lea.vmem [#allocation2], %s699
        %s701 = sand.u32 %s212, 1
        %s702 = scalar_lea.sflag [#allocation5], %s701
        %s703 = sand.u32 %s212, 1
        %s704 = smul.addr %s703, 8
        %s705 = scalar_lea.vmem [#allocation4], %s704
        // Predicated region
        $region49: #{mlp_regressor_forward.1} parent=47 // pred_check
          %p706 = pneg %p196
        $region50: #{mlp_regressor_forward.1} parent=47 // pred_check_branch
          %708 = sbr.rel (%p706) target = $region52
        $region51: #{mlp_regressor_forward.1} parent=47 // pred_region
          %s710 = ssub.s32 128, 128
          %711 = vsyncadd %s697, %s710
          %s712 = smul.addr %s26, 128
          %s713 = scalar_lea.hbm %s7, %s712
          %s715 = sshll.u32 %s700, 4
          %s716 = int_to_ptr.vmem [resolvable:$true] %s715
          %718 = dma.vmem_to_hbm [thread:$0]  %s716, 128, %s713, %s697
        $region52: #{mlp_regressor_forward.1} parent=47 // pred_fallthru
          _
        // Predicated region
        $region53: #{mlp_regressor_forward.1} parent=47 // pred_check
          %p719 = pneg %p222
        $region54: #{mlp_regressor_forward.1} parent=47 // pred_check_branch
          %721 = sbr.rel (%p719) target = $region56
        $region55: #{mlp_regressor_forward.1} parent=47 // pred_region
          %s723 = ssub.s32 128, 128
          %724 = vsyncadd %s702, %s723
          %s725 = smul.addr %s26, 128
          %s726 = scalar_lea.hbm %s8, %s725
          %s728 = sshll.u32 %s705, 4
          %s729 = int_to_ptr.vmem [resolvable:$true] %s728
          %731 = dma.vmem_to_hbm [thread:$0]  %s729, 128, %s726, %s702
        $region56: #{mlp_regressor_forward.1} parent=47 // pred_fallthru
          _
      $region48: #{mlp_regressor_forward.1} parent=5 // pred_fallthru
        _
      %p732 = scmp.le.s32.totalorder 2, %s21
      // Predicated region
      $region57: #{mlp_regressor_forward.1} parent=5 // pred_check
        %p733 = pneg %p732
      $region58: #{mlp_regressor_forward.1} parent=5 // pred_check_branch
        %735 = sbr.rel (%p733) target = $region60
      $region59: #{mlp_regressor_forward.1} parent=5 // pred_region
        %s736 = ssub.s32 %s21, 2
        // Predicated region
        $region61: #{mlp_regressor_forward.1} parent=59 // pred_check
          %p737 = pneg %p202
        $region62: #{mlp_regressor_forward.1} parent=59 // pred_check_branch
          %739 = sbr.rel (%p737) target = $region64
        $region63: #{mlp_regressor_forward.1} parent=59 // pred_region
          %s740 = sand.u32 %s187, 1
          %s741 = scalar_lea.sflag [#allocation3], %s740
          %s742 = sand.u32 %s187, 1
          %s743 = smul.addr %s742, 8
          %s744 = scalar_lea.vmem [#allocation2], %s743
          %745 = dma.done %s741, 128
        $region64: #{mlp_regressor_forward.1} parent=59 // pred_fallthru
          _
        // Predicated region
        $region65: #{mlp_regressor_forward.1} parent=59 // pred_check
          %p746 = pneg %p228
        $region66: #{mlp_regressor_forward.1} parent=59 // pred_check_branch
          %748 = sbr.rel (%p746) target = $region68
        $region67: #{mlp_regressor_forward.1} parent=59 // pred_region
          %s749 = sand.u32 %s213, 1
          %s750 = scalar_lea.sflag [#allocation5], %s749
          %s751 = sand.u32 %s213, 1
          %s752 = smul.addr %s751, 8
          %s753 = scalar_lea.vmem [#allocation4], %s752
          %754 = dma.done %s750, 128
        $region68: #{mlp_regressor_forward.1} parent=59 // pred_fallthru
          _
      $region60: #{mlp_regressor_forward.1} parent=5 // pred_fallthru
        _
    $region6: #{mlp_regressor_forward.1} parent=1 // loop_footer
      %s25 = sadd.s32 1, %s21
    $region7: #{mlp_regressor_forward.1} parent=1 // loop_footer_branch
      %20 = sbr.rel target = $region3
    $region8: #{mlp_regressor_forward.1} parent=1 // loop_exit
      _
    %755 = vsyncpa [#allocation3], 1
    %s756 = scalar_lea.sflag [#allocation3], 1
    %757 = vsyncpa %s756, 1
    %758 = vsyncpa [#allocation5], 1
    %s759 = scalar_lea.sflag [#allocation5], 1
    %760 = vsyncpa %s759, 1

</llo_original>
